<compile_context>
chip_gen: v7x
topology: tpu7x:2x2x1
jax: 0.10.0
libtpu: 0.0.40
codegen_flags: <defaults>
</compile_context>

<pallas_src>
import math
import functools

import jax
import jax.numpy as jnp
from jax import lax
from jax.experimental import pallas as pl
from jax.experimental.pallas import tpu as pltpu

_LANES = 128
_MS_WEIGHTS = (0.0448, 0.2856, 0.3001, 0.2363, 0.1333)   # pytorch_msssim defaults
_WIN_SIZE = 11
_WIN_SIGMA = 1.5


# -----------------------------------------------------------------------------
# Kernel 1: fused sum(log(.)) over all likelihood tensors (single launch).
# Inputs are reshaped to sublane/lane-dense (rows, 128) slabs in the wrapper.
# -----------------------------------------------------------------------------
def _log_sums_kernel(*refs):
    o_ref = refs[-1]
    in_refs = refs[:-1]
    row = lax.broadcasted_iota(jnp.int32, o_ref.shape, 0)
    acc = jnp.zeros(o_ref.shape, jnp.float32)
    for i, r in enumerate(in_refs):
        s = jnp.sum(jnp.log(r[...].astype(jnp.float32)))
        acc = acc + jnp.where(row == i, s, 0.0)
    o_ref[...] = acc


def _dense_slab(x):
    """Flatten and pad (with ones: log(1)=0) to a lane/sublane-dense (rows,128) slab."""
    flat = x.reshape(-1)
    pad = (-flat.shape[0]) % (8 * _LANES)
    if pad:
        flat = jnp.concatenate([flat, jnp.ones((pad,), flat.dtype)])
    return flat.reshape(-1, _LANES)


def fused_log_sums(tensors):
    slabs = [_dense_slab(t) for t in tensors]
    rows = 8 * ((len(tensors) + 7) // 8)
    out = pl.pallas_call(
        _log_sums_kernel,
        out_shape=jax.ShapeDtypeStruct((rows, _LANES), jnp.float32),
        in_specs=[pl.BlockSpec(memory_space=pltpu.MemorySpace.VMEM)] * len(slabs),
        out_specs=pl.BlockSpec(memory_space=pltpu.MemorySpace.VMEM),
    )(*slabs)
    return [out[i, 0] for i in range(len(tensors))]


# -----------------------------------------------------------------------------
# Kernel 2: one MS-SSIM level, gridded over the N*C images.  Per grid step:
#   * valid separable Gaussian blur of [x, y, x*x, y*y, x*y] as one wide
#     column-pass matmul plus five row-pass matmuls sharing gh,
#   * SSIM / CS maps and their spatial means,
#   * fused sum((x-y)^2) (used by MSE at level 0; ~free VPU filler),
#   * optionally the 2x average-pooled x / y for the next level (two matmuls
#     on data already in VMEM).
# stats output row 0 = ssim mean, row 1 = cs mean, row 2 = sum((x-y)^2).
# -----------------------------------------------------------------------------
def _ssim_level_kernel(*refs, c1, c2, emit_pool):
    if emit_pool:
        (x_ref, y_ref, gh_ref, gw_ref, ph_ref, pw_ref,
         stats_ref, xp_ref, yp_ref) = refs
    else:
        x_ref, y_ref, gh_ref, gw_ref, stats_ref = refs

    x = x_ref[0].astype(jnp.float32)          # (H, W)
    y = y_ref[0].astype(jnp.float32)
    gh = gh_ref[...]                          # (Hout, H)
    gw = gw_ref[...]                          # (W, Wout)
    h = x.shape[0]

    prods = [x, y, x * x, y * y, x * y]
    if h % 8 == 0:
        # One wide MXU call for the column pass (M = 5H keeps the 256-wide MXUs
        # on v6e/v7x full), then five row passes sharing gh.
        cat = jnp.concatenate(prods, axis=0)                            # (5H, W)
        t = jnp.dot(cat, gw, preferred_element_type=jnp.float32)        # (5H, Wout)
        cols = [t[i * h:(i + 1) * h, :] for i in range(5)]
    else:
        # Tiny trailing level (H not a sublane multiple): keep blurs separate.
        cols = [jnp.dot(p, gw, preferred_element_type=jnp.float32) for p in prods]
    mu1, mu2, sxx, syy, sxy = [
        jnp.dot(gh, cb, preferred_element_type=jnp.float32) for cb in cols]

    mu1_sq = mu1 * mu1
    mu2_sq = mu2 * mu2
    mu1_mu2 = mu1 * mu2
    s11 = sxx - mu1_sq
    s22 = syy - mu2_sq
    s12 = sxy - mu1_mu2

    # approx reciprocal -> EUP slot (otherwise idle); acceptable for a loss.
    cs_map = (2.0 * s12 + c2) * pl.reciprocal(s11 + s22 + c2, approx=True)
    ssim_map = ((2.0 * mu1_mu2 + c1)
                * pl.reciprocal(mu1_sq + mu2_sq + c1, approx=True)) * cs_map

    d = x - y
    se_sum = jnp.sum(d * d)                   # fused squared-error sum

    row = lax.broadcasted_iota(jnp.int32, (3, _LANES), 0)
    stats_ref[0] = jnp.where(
        row == 0, jnp.mean(ssim_map),
        jnp.where(row == 1, jnp.mean(cs_map), se_sum))

    if emit_pool:
        ph = ph_ref[...]                      # (H/2, H)
        pw = pw_ref[...]                      # (W, W/2)
        xp_ref[0] = jnp.dot(jnp.dot(ph, x, preferred_element_type=jnp.float32),
                            pw, preferred_element_type=jnp.float32).astype(xp_ref.dtype)
        yp_ref[0] = jnp.dot(jnp.dot(ph, y, preferred_element_type=jnp.float32),
                            pw, preferred_element_type=jnp.float32).astype(yp_ref.dtype)


def _gauss_win(size=_WIN_SIZE, sigma=_WIN_SIGMA):
    coords = jnp.arange(size, dtype=jnp.float32) - (size // 2)
    g = jnp.exp(-(coords ** 2) / (2.0 * sigma ** 2))
    return g / jnp.sum(g)


def _band_matrix(size_in, win):
    # Banded matrix B with (x @ B)[., o] = sum_k win[k] * x[., o + k]  (valid conv)
    k = win.shape[0]
    size_out = size_in - k + 1
    rows = jnp.arange(size_in)[:, None]
    cols = jnp.arange(size_out)[None, :]
    diff = rows - cols
    mask = (diff >= 0) & (diff < k)
    return jnp.where(mask, win[jnp.clip(diff, 0, k - 1)], 0.0).astype(jnp.float32)


def _pool_matrix(size):
    # P with (P @ x)[i, .] = 0.5 * (x[2i, .] + x[2i+1, .])
    rows = jnp.arange(size // 2)[:, None]
    cols = jnp.arange(size)[None, :]
    sel = (cols == 2 * rows) | (cols == 2 * rows + 1)
    return jnp.where(sel, 0.5, 0.0).astype(jnp.float32)


def _ssim_level(x3, y3, win, *, emit_pool, data_range=1.0, k1=0.01, k2=0.03):
    nc, h, w = x3.shape
    hout = h - _WIN_SIZE + 1
    wout = w - _WIN_SIZE + 1
    gh = _band_matrix(h, win).T              # (Hout, H)
    gw = _band_matrix(w, win)                # (W, Wout)
    c1 = float((k1 * data_range) ** 2)
    c2 = float((k2 * data_range) ** 2)

    inputs = [x3, y3, gh, gw]
    in_specs = [
        pl.BlockSpec((1, h, w), lambda n: (n, 0, 0)),
        pl.BlockSpec((1, h, w), lambda n: (n, 0, 0)),
        pl.BlockSpec((hout, h), lambda n: (0, 0)),
        pl.BlockSpec((w, wout), lambda n: (0, 0)),
    ]
    out_shape = [jax.ShapeDtypeStruct((nc, 3, _LANES), jnp.float32)]
    out_specs = [pl.BlockSpec((1, 3, _LANES), lambda n: (n, 0, 0))]
    if emit_pool:
        inputs += [_pool_matrix(h), _pool_matrix(w).T]
        in_specs += [pl.BlockSpec((h // 2, h), lambda n: (0, 0)),
                     pl.BlockSpec((w, w // 2), lambda n: (0, 0))]
        out_shape += [jax.ShapeDtypeStruct((nc, h // 2, w // 2), x3.dtype),
                      jax.ShapeDtypeStruct((nc, h // 2, w // 2), y3.dtype)]
        out_specs += [pl.BlockSpec((1, h // 2, w // 2), lambda n: (n, 0, 0))] * 2

    # Per-step VMEM (double-buffered per-image blocks + shared gh/gw/ph/pw +
    # in-kernel temporaries) is a few MiB -- comfortably under the default
    # scoped limit even on v7x, so no vmem_limit_bytes override is needed.
    return pl.pallas_call(
        functools.partial(_ssim_level_kernel, c1=c1, c2=c2, emit_pool=emit_pool),
        grid=(nc,),
        out_shape=tuple(out_shape),
        in_specs=in_specs,
        out_specs=tuple(out_specs),
        compiler_params=pltpu.CompilerParams(
            dimension_semantics=("parallel",)),   # v7x: shard images across TCs
    )(*inputs)


def ms_ssim_and_se(x, y, data_range=1.0):
    """Returns (ms_ssim with size_average=True, sum((x-y)^2) fused at level 0)."""
    n, c, h, w = x.shape
    nc = n * c
    win = _gauss_win()
    weights = jnp.array(_MS_WEIGHTS, jnp.float32)
    levels = len(_MS_WEIGHTS)
    assert min(h, w) > (_WIN_SIZE - 1) * 2 ** 4, "image too small for 5-level MS-SSIM"

    X = x.reshape(nc, h, w)
    Y = y.reshape(nc, h, w)
    mcs = []
    ssim_pc = None
    se_sum = None
    for i in range(levels):
        emit_pool = i < levels - 1
        res = _ssim_level(X, Y, win, emit_pool=emit_pool, data_range=data_range)
        stats = res[0]                         # (nc, 3, 128)
        ssim_pc = stats[:, 0, 0]
        cs_pc = stats[:, 1, 0]
        if i == 0:
            se_sum = jnp.sum(stats[:, 2, 0])
        if emit_pool:
            mcs.append(jnp.maximum(cs_pc, 0.0))            # relu(cs)
            # TODO(synk): in-kernel pooling assumes even H/W at every level; odd
            # sizes would need pytorch_msssim's padded avg_pool2d path.
            X, Y = res[1], res[2]
    ssim_pc = jnp.maximum(ssim_pc, 0.0)                    # relu(ssim)
    stacked = jnp.stack(mcs + [ssim_pc], axis=0)           # (levels, nc)
    msv = jnp.prod(stacked ** weights[:, None], axis=0)
    return jnp.mean(msv), se_sum                           # size_average=True


# -----------------------------------------------------------------------------
# RateDistortionLoss.forward
# -----------------------------------------------------------------------------
def rate_distortion_loss(output, target, lmbda=0.01):
    n, c, h, w = target.shape
    num_pixels = n * h * w
    ln2 = math.log(2.0)
    ln10 = math.log(10.0)

    names = list(output['likelihoods'].keys())
    sums = fused_log_sums([output['likelihoods'][k] for k in names])
    bpp = {k: s / (-ln2 * num_pixels) for k, s in zip(names, sums)}

    out = {}
    out['bpp_loss'] = sum(bpp.values())
    out['bpp_y'] = bpp['y']
    out['bpp_z'] = bpp['z']

    msssim, se_sum = ms_ssim_and_se(output['x_hat'], target, data_range=1.0)
    mse = se_sum / float(n * c * h * w)
    out['mse_loss'] = mse
    out['psnr'] = 10.0 * (jnp.log(1.0 / mse) / ln10)
    out['msssim'] = msssim
    out['msssimDB'] = -10.0 * (jnp.log(1.0 - msssim) / ln10)
    out['loss'] = lmbda * (255.0 ** 2) * mse + out['bpp_loss']
    return out


if __name__ == "__main__":
    key = jax.random.PRNGKey(0)
    k1, k2, k3, k4 = jax.random.split(key, 4)

    # MS-SSIM with the default 5 levels / win_size=11 requires min(H, W) > 160.
    N, C, H, W = 2, 3, 192, 192
    target = jax.random.uniform(k1, (N, C, H, W), jnp.float32)
    x_hat = jnp.clip(
        target + 0.05 * jax.random.normal(k2, (N, C, H, W), jnp.float32), 0.0, 1.0)
    lik_y = jax.random.uniform(k3, (N, 8, H // 16, W // 16), jnp.float32,
                               minval=0.01, maxval=1.0)
    lik_z = jax.random.uniform(k4, (N, 4, H // 64, W // 64), jnp.float32,
                               minval=0.01, maxval=1.0)

    output = {'x_hat': x_hat, 'likelihoods': {'y': lik_y, 'z': lik_z}}
    result = rate_distortion_loss(output, target, lmbda=0.01)
    jax.block_until_ready(result)
    print("KERNEL_OK")
</pallas_src>

<mosaic_0001>
module attributes {stable_mosaic.version = 11 : i64} {
  func.func @_log_sums_kernel(%arg0: memref<24x128xf32, #tpu.memory_space<vmem>>, %arg1: memref<8x128xf32, #tpu.memory_space<vmem>>, %arg2: memref<8x128xf32, #tpu.memory_space<vmem>>) attributes {dimension_semantics = [], scalar_prefetch = 0 : i64, scratch_operands = 0 : i64, tpu.core_type = #tpu.core_type<tc>} {
    %0 = tpu.iota {dimensions = array<i32: 0>} : vector<8x128xi32>
    %cst = arith.constant 0.000000e+00 : f32
    %1 = vector.broadcast %cst : f32 to vector<8x128xf32>
    %c0 = arith.constant 0 : index
    %c0_0 = arith.constant 0 : index
    %2 = vector.load %arg0[%c0, %c0_0] : memref<24x128xf32, #tpu.memory_space<vmem>>, vector<24x128xf32>
    %3 = math.log %2 : vector<24x128xf32>
    %4 = vector.shape_cast %3 : vector<24x128xf32> to vector<1x24x128xf32>
    %cst_1 = arith.constant dense<0.000000e+00> : vector<1xf32>
    %5 = vector.multi_reduction <add>, %4, %cst_1 [1, 2] : vector<1x24x128xf32> to vector<1xf32>
    %6 = vector.shape_cast %5 : vector<1xf32> to vector<1x1x1xf32>
    %7 = vector.extract %6[0, 0, 0] : f32 from vector<1x1x1xf32>
    %c0_i32 = arith.constant 0 : i32
    %8 = vector.broadcast %c0_i32 : i32 to vector<8x128xi32>
    %9 = arith.cmpi eq, %0, %8 : vector<8x128xi32>
    %cst_2 = arith.constant 0.000000e+00 : f32
    %10 = vector.broadcast %7 : f32 to vector<8x128xf32>
    %11 = vector.broadcast %cst_2 : f32 to vector<8x128xf32>
    %12 = arith.select %9, %10, %11 : vector<8x128xi1>, vector<8x128xf32>
    %13 = arith.addf %1, %12 : vector<8x128xf32>
    %c0_3 = arith.constant 0 : index
    %c0_4 = arith.constant 0 : index
    %14 = vector.load %arg1[%c0_3, %c0_4] : memref<8x128xf32, #tpu.memory_space<vmem>>, vector<8x128xf32>
    %15 = math.log %14 : vector<8x128xf32>
    %16 = vector.shape_cast %15 : vector<8x128xf32> to vector<1x8x128xf32>
    %cst_5 = arith.constant dense<0.000000e+00> : vector<1xf32>
    %17 = vector.multi_reduction <add>, %16, %cst_5 [1, 2] : vector<1x8x128xf32> to vector<1xf32>
    %18 = vector.shape_cast %17 : vector<1xf32> to vector<1x1x1xf32>
    %19 = vector.extract %18[0, 0, 0] : f32 from vector<1x1x1xf32>
    %c1_i32 = arith.constant 1 : i32
    %20 = vector.broadcast %c1_i32 : i32 to vector<8x128xi32>
    %21 = arith.cmpi eq, %0, %20 : vector<8x128xi32>
    %cst_6 = arith.constant 0.000000e+00 : f32
    %22 = vector.broadcast %19 : f32 to vector<8x128xf32>
    %23 = vector.broadcast %cst_6 : f32 to vector<8x128xf32>
    %24 = arith.select %21, %22, %23 : vector<8x128xi1>, vector<8x128xf32>
    %25 = arith.addf %13, %24 : vector<8x128xf32>
    %c0_7 = arith.constant 0 : index
    %c0_8 = arith.constant 0 : index
    %26 = vector.load %arg2[%c0_7, %c0_8] : memref<8x128xf32, #tpu.memory_space<vmem>>, vector<8x128xf32>
    tpu.vector_store %arg2[%c0_7, %c0_8], %25 {strides = array<i32>} : memref<8x128xf32, #tpu.memory_space<vmem>>, vector<8x128xf32>,
    return
  }
}

</mosaic_0001>

<llo_original>
// kernel: tpu_custom_call.1
$region0: #{tpu_custom_call.1}
  #allocation0 [shape = 'u32[]', space=smem, size = 0x4, offset = 0x4, fixed_abs, tag = 'smem constant byte address 0x4 - core index']
  #allocation1 [shape = 'u32[144,128]{1,0:T(1,128)}', space=vmem, size = 0x12000, scoped, tag = 'internal scratch']
  %s0 = inlined_call_operand.hbm [shape: f32[24,128], index: 0, kind: input, shape index: {}]
  %s1 = inlined_call_operand.hbm [shape: f32[8,128], index: 1, kind: input, shape index: {}]
  %s2 = inlined_call_operand.hbm [shape: f32[8,128], index: 2, kind: output, shape index: {}]
  %s3 = sld [smem:[#allocation0]]
  $region26: #{tpu_custom_call.1} parent=0
    _
  %s5 = ssub.s32 1, %s3
  %s6 = scalar_select 0, %s5, %s3
  $region1: #{tpu_custom_call.1} parent=0
    #allocation2 [shape = 'u8[12288]{0}', space=vmem, size = 0x3000, scoped, tag = 'input window, operand 0, single buffered']
    #allocation3 [shape = 's32[1]{0}', space=sflag, size = 0x4, scoped, tag = 'scoped memory for tpu_custom_call.1']
    #allocation4 [shape = 's32[1]{0}', space=sflag, size = 0x4, scoped, tag = 'scoped memory for tpu_custom_call.1']
    #allocation5 [shape = 'u8[4096]{0}', space=vmem, size = 0x1000, scoped, tag = 'input window, operand 1, single buffered']
    #allocation6 [shape = 's32[1]{0}', space=sflag, size = 0x4, scoped, tag = 'scoped memory for tpu_custom_call.1']
    #allocation7 [shape = 'u8[4096]{0}', space=vmem, size = 0x1000, scoped, tag = 'output window, operand 0, single buffered']
    %7 = vsyncpa [#allocation3], 0
    %8 = vsyncpa [#allocation6], 0
    %9 = vsyncpa [#allocation4], 0
    // Predicated region
    $region2: #{tpu_custom_call.1} parent=1 // pred_check
      _
    $region3: #{tpu_custom_call.1} parent=1 // pred_check_branch
      %11 = sbr.rel (0) target = $region5
    $region4: #{tpu_custom_call.1} parent=1 // pred_region
      %s13 = ssub.s32 384, 384
      %14 = vsyncadd [#allocation3], %s13
      %s15 = sshll.u32 [#allocation2], 4
      %s16 = int_to_ptr.vmem [resolvable:$true] %s15
      %21 = dma.hbm_to_vmem [thread:$0]  %s0, 384, %s16, [#allocation3], 128, 128, 8
    $region5: #{tpu_custom_call.1} parent=1 // pred_fallthru
      _
    // Predicated region
    $region6: #{tpu_custom_call.1} parent=1 // pred_check
      _
    $region7: #{tpu_custom_call.1} parent=1 // pred_check_branch
      %23 = sbr.rel (0) target = $region9
    $region8: #{tpu_custom_call.1} parent=1 // pred_region
      %s25 = ssub.s32 128, 128
      %26 = vsyncadd [#allocation6], %s25
      %s28 = sshll.u32 [#allocation5], 4
      %s29 = int_to_ptr.vmem [resolvable:$true] %s28
      %31 = dma.hbm_to_vmem [thread:$0]  %s1, 128, %s29, [#allocation6]
    $region9: #{tpu_custom_call.1} parent=1 // pred_fallthru
      _
    // Predicated region
    $region10: #{tpu_custom_call.1} parent=1 // pred_check
      _
    $region11: #{tpu_custom_call.1} parent=1 // pred_check_branch
      %33 = sbr.rel (0) target = $region13
    $region12: #{tpu_custom_call.1} parent=1 // pred_region
      %34 = dma.done [#allocation3], 384
    $region13: #{tpu_custom_call.1} parent=1 // pred_fallthru
      _
    // Predicated region
    $region14: #{tpu_custom_call.1} parent=1 // pred_check
      _
    $region15: #{tpu_custom_call.1} parent=1 // pred_check_branch
      %36 = sbr.rel (0) target = $region17
    $region16: #{tpu_custom_call.1} parent=1 // pred_region
      %37 = dma.done [#allocation6], 128
    $region17: #{tpu_custom_call.1} parent=1 // pred_fallthru
      _
    %v38 = vlaneseq
    %v39 = vshrl.u32 %v38, 7
    %v40 = vld [vmem:[#allocation2] sm:$0xff]
    %v41 = vld [vmem:[#allocation2 + $0x8] sm:$0xff]
    %v42 = vld [vmem:[#allocation2 + $0x10] sm:$0xff]
    %v43 = vlog2.pop %v40
    %v44 = vmul.f32 %v43, 0.6931472
    %v45 = vlog2.pop %v41
    %v46 = vmul.f32 %v45, 0.6931472
    %v47 = vlog2.pop %v42
    %v48 = vmul.f32 %v47, 0.6931472
    %v49 = vadd.f32 %v44, %v46
    %v50 = vadd.f32 %v49, %v48
    %51 = vadd.xlane.f32.xlu0 %v50
    %v52 = vpop.xlane.xlu0 %51
    %v53 = vrot.slane %v52, 4
    %v54 = vadd.f32 %v52, %v53
    %v55 = vrot.slane %v54, 2
    %v56 = vadd.f32 %v54, %v55
    %v57 = vrot.slane %v56, 1
    %v58 = vadd.f32 %v56, %v57
    %s59 = vtos %v58
    %vm60 = vcmp.eq.s32.totalorder %v39, 0
    %v61 = vstv %s59
    %v62 = vsel %vm60, %v61, 0.0
    %v63 = vadd.f32 %v62, 0.0
    %v64 = vld [vmem:[#allocation5] sm:$0xff]
    %v65 = vlog2.pop %v64
    %v66 = vmul.f32 %v65, 0.6931472
    %67 = vadd.xlane.f32.xlu0 %v66
    %v68 = vpop.xlane.xlu0 %67
    %v69 = vrot.slane %v68, 4
    %v70 = vadd.f32 %v68, %v69
    %v71 = vrot.slane %v70, 2
    %v72 = vadd.f32 %v70, %v71
    %v73 = vrot.slane %v72, 1
    %v74 = vadd.f32 %v72, %v73
    %s75 = vtos %v74
    %vm76 = vcmp.eq.s32.totalorder %v39, 1
    %v77 = vstv %s75
    %v78 = vsel %vm76, %v77, 0.0
    %v79 = vadd.f32 %v63, %v78
    %80 = vst [vmem:[#allocation7] sm:$0xff] %v79
    // Predicated region
    $region18: #{tpu_custom_call.1} parent=1 // pred_check
      _
    $region19: #{tpu_custom_call.1} parent=1 // pred_check_branch
      %82 = sbr.rel (0) target = $region21
    $region20: #{tpu_custom_call.1} parent=1 // pred_region
      %s84 = ssub.s32 128, 128
      %85 = vsyncadd [#allocation4], %s84
      %s87 = sshll.u32 [#allocation7], 4
      %s88 = int_to_ptr.vmem [resolvable:$true] %s87
      %90 = dma.vmem_to_hbm [thread:$0]  %s88, 128, %s2, [#allocation4]
    $region21: #{tpu_custom_call.1} parent=1 // pred_fallthru
      _
    // Predicated region
    $region22: #{tpu_custom_call.1} parent=1 // pred_check
      _
    $region23: #{tpu_custom_call.1} parent=1 // pred_check_branch
      %92 = sbr.rel (0) target = $region25
    $region24: #{tpu_custom_call.1} parent=1 // pred_region
      %93 = dma.done [#allocation4], 128
    $region25: #{tpu_custom_call.1} parent=1 // pred_fallthru
      _
    %94 = vsyncpa [#allocation3], 1
    %95 = vsyncpa [#allocation6], 1
    %96 = vsyncpa [#allocation4], 1

</llo_original>
